<compile_context>
chip_gen: v5e
topology: v5e:2x2
jax: 0.10.0
libtpu: 0.0.40
codegen_flags: <defaults>
</compile_context>

<pallas_src>
import jax
import jax.numpy as jnp
from jax.experimental import pallas as pl
from jax.experimental.pallas import tpu as pltpu

_LANE = 512        # lane-dense last dim (multiple of 128)
_TILE_ROWS = 512   # 512x512 f32 tile = 1 MiB per array per pipeline buffer


def _round_up(a, b):
    return (a + b - 1) // b * b


def _elementwise_kernel(x_ref,
                        add_ref, sub_ref, mul_ref, div_ref, pow_ref,
                        gt_ref, lt_ref):
    x = x_ref[...]
    add_ref[...] = x + 2.0
    sub_ref[...] = x - 2.0
    mul_ref[...] = x * 2.0
    div_ref[...] = x * 0.5          # exact: 0.5 is a power of two
    pow_ref[...] = x * x
    # int8 masks: 4x less HBM write traffic than int32; bool cast happens
    # outside the kernel and is nearly free.
    gt_ref[...] = (x > 1.0).astype(jnp.int8)
    lt_ref[...] = (x < 1.0).astype(jnp.int8)


def pt_module_forward(x):
    """Mirrors PtModule.forward: returns a dict of elementwise results."""
    orig_shape = x.shape
    dtype = x.dtype
    total = x.size

    # ---- layout plumbing (outside the kernel): flatten to a lane-dense slab.
    flat = x.reshape(-1)
    padded_total = _round_up(max(total, 1), _LANE)
    rows = padded_total // _LANE
    if rows > _TILE_ROWS:
        # Tile the row axis; pad rows up to a whole number of tiles.
        rows = _round_up(rows, _TILE_ROWS)
        tile_rows = _TILE_ROWS
    else:
        # Single tile covering everything; keep rows a multiple of 32 so the
        # int8 outputs pack cleanly into native (32, 128) tiles.
        rows = _round_up(rows, 32)
        tile_rows = rows
    padded_total = rows * _LANE
    if padded_total != total:
        flat = jnp.pad(flat, (0, padded_total - total))
    x2d = flat.reshape(rows, _LANE)

    grid = (rows // tile_rows,)
    spec = pl.BlockSpec((tile_rows, _LANE), lambda i: (i, 0))

    out_shapes = (
        jax.ShapeDtypeStruct((rows, _LANE), dtype),      # addition
        jax.ShapeDtypeStruct((rows, _LANE), dtype),      # subtraction
        jax.ShapeDtypeStruct((rows, _LANE), dtype),      # multiplication
        jax.ShapeDtypeStruct((rows, _LANE), dtype),      # division
        jax.ShapeDtypeStruct((rows, _LANE), dtype),      # power
        jax.ShapeDtypeStruct((rows, _LANE), jnp.int8),   # greater_than mask
        jax.ShapeDtypeStruct((rows, _LANE), jnp.int8),   # less_than mask
    )

    outs = pl.pallas_call(
        _elementwise_kernel,
        out_shape=out_shapes,
        grid=grid,
        in_specs=[spec],
        out_specs=tuple(spec for _ in out_shapes),
        compiler_params=pltpu.CompilerParams(
            dimension_semantics=("parallel",),
            vmem_limit_bytes=32 * 1024 * 1024,
        ),
    )(x2d)

    def _restore(a):
        return a.reshape(-1)[:total].reshape(orig_shape)

    add, sub, mul, div, pw, gt, lt = outs
    return {
        "addition": _restore(add),
        "subtraction": _restore(sub),
        "multiplication": _restore(mul),
        "division": _restore(div),
        "power": _restore(pw),
        "greater_than": _restore(gt).astype(jnp.bool_),
        "less_than": _restore(lt).astype(jnp.bool_),
    }


if __name__ == "__main__":
    key = jax.random.PRNGKey(0)
    # Small NCHW input consistent with a generic tensor forward.
    x = jax.random.normal(key, (2, 4, 16, 16), dtype=jnp.float32)

    result = pt_module_forward(x)
    jax.block_until_ready(result)

    # Lightweight correctness check against plain JAX reference.
    ref = {
        "addition": x + 2,
        "subtraction": x - 2,
        "multiplication": x * 2,
        "division": x / 2,
        "power": x ** 2,
        "greater_than": x > 1,
        "less_than": x < 1,
    }
    for k in ref:
        assert result[k].shape == ref[k].shape, k
        assert result[k].dtype == ref[k].dtype, k
        assert jnp.allclose(result[k].astype(jnp.float32),
                            ref[k].astype(jnp.float32), atol=1e-6), k

    print("KERNEL_OK")
</pallas_src>

<mosaic_0001>
module attributes {stable_mosaic.version = 11 : i64} {
  func.func @_elementwise_kernel(%arg0: i32, %arg1: memref<32x512xf32, #tpu.memory_space<vmem>>, %arg2: memref<32x512xf32, #tpu.memory_space<vmem>>, %arg3: memref<32x512xf32, #tpu.memory_space<vmem>>, %arg4: memref<32x512xf32, #tpu.memory_space<vmem>>, %arg5: memref<32x512xf32, #tpu.memory_space<vmem>>, %arg6: memref<32x512xf32, #tpu.memory_space<vmem>>, %arg7: memref<32x512xi8, #tpu.memory_space<vmem>>, %arg8: memref<32x512xi8, #tpu.memory_space<vmem>>) attributes {dimension_semantics = [#tpu.dimension_semantics<parallel>], iteration_bounds = array<i64: 1>, scalar_prefetch = 0 : i64, scratch_operands = 0 : i64, tpu.core_type = #tpu.core_type<tc>, window_params = [{transform_indices = @transform_0, window_bounds = array<i64: 32, 512>}, {transform_indices = @transform_1, window_bounds = array<i64: 32, 512>}, {transform_indices = @transform_2, window_bounds = array<i64: 32, 512>}, {transform_indices = @transform_3, window_bounds = array<i64: 32, 512>}, {transform_indices = @transform_4, window_bounds = array<i64: 32, 512>}, {transform_indices = @transform_5, window_bounds = array<i64: 32, 512>}, {transform_indices = @transform_6, window_bounds = array<i64: 32, 512>}, {transform_indices = @transform_7, window_bounds = array<i64: 32, 512>}]} {
    %c0 = arith.constant 0 : index
    %c0_0 = arith.constant 0 : index
    %0 = vector.load %arg1[%c0, %c0_0] : memref<32x512xf32, #tpu.memory_space<vmem>>, vector<32x512xf32>
    %cst = arith.constant 2.000000e+00 : f32
    %1 = vector.broadcast %cst : f32 to vector<32x512xf32>
    %2 = arith.addf %0, %1 : vector<32x512xf32>
    %c0_1 = arith.constant 0 : index
    %c0_2 = arith.constant 0 : index
    %3 = vector.load %arg2[%c0_1, %c0_2] : memref<32x512xf32, #tpu.memory_space<vmem>>, vector<32x512xf32>
    tpu.vector_store %arg2[%c0_1, %c0_2], %2 {strides = array<i32>} : memref<32x512xf32, #tpu.memory_space<vmem>>, vector<32x512xf32>,
    %cst_3 = arith.constant 2.000000e+00 : f32
    %4 = vector.broadcast %cst_3 : f32 to vector<32x512xf32>
    %5 = arith.subf %0, %4 : vector<32x512xf32>
    %c0_4 = arith.constant 0 : index
    %c0_5 = arith.constant 0 : index
    %6 = vector.load %arg3[%c0_4, %c0_5] : memref<32x512xf32, #tpu.memory_space<vmem>>, vector<32x512xf32>
    tpu.vector_store %arg3[%c0_4, %c0_5], %5 {strides = array<i32>} : memref<32x512xf32, #tpu.memory_space<vmem>>, vector<32x512xf32>,
    %cst_6 = arith.constant 2.000000e+00 : f32
    %7 = vector.broadcast %cst_6 : f32 to vector<32x512xf32>
    %8 = arith.mulf %0, %7 : vector<32x512xf32>
    %c0_7 = arith.constant 0 : index
    %c0_8 = arith.constant 0 : index
    %9 = vector.load %arg4[%c0_7, %c0_8] : memref<32x512xf32, #tpu.memory_space<vmem>>, vector<32x512xf32>
    tpu.vector_store %arg4[%c0_7, %c0_8], %8 {strides = array<i32>} : memref<32x512xf32, #tpu.memory_space<vmem>>, vector<32x512xf32>,
    %cst_9 = arith.constant 5.000000e-01 : f32
    %10 = vector.broadcast %cst_9 : f32 to vector<32x512xf32>
    %11 = arith.mulf %0, %10 : vector<32x512xf32>
    %c0_10 = arith.constant 0 : index
    %c0_11 = arith.constant 0 : index
    %12 = vector.load %arg5[%c0_10, %c0_11] : memref<32x512xf32, #tpu.memory_space<vmem>>, vector<32x512xf32>
    tpu.vector_store %arg5[%c0_10, %c0_11], %11 {strides = array<i32>} : memref<32x512xf32, #tpu.memory_space<vmem>>, vector<32x512xf32>,
    %13 = arith.mulf %0, %0 : vector<32x512xf32>
    %c0_12 = arith.constant 0 : index
    %c0_13 = arith.constant 0 : index
    %14 = vector.load %arg6[%c0_12, %c0_13] : memref<32x512xf32, #tpu.memory_space<vmem>>, vector<32x512xf32>
    tpu.vector_store %arg6[%c0_12, %c0_13], %13 {strides = array<i32>} : memref<32x512xf32, #tpu.memory_space<vmem>>, vector<32x512xf32>,
    %cst_14 = arith.constant 1.000000e+00 : f32
    %15 = vector.broadcast %cst_14 : f32 to vector<32x512xf32>
    %16 = arith.cmpf ogt, %0, %15 : vector<32x512xf32>
    %17 = arith.extui %16 : vector<32x512xi1> to vector<32x512xi8>
    %c0_15 = arith.constant 0 : index
    %c0_16 = arith.constant 0 : index
    %18 = vector.load %arg7[%c0_15, %c0_16] : memref<32x512xi8, #tpu.memory_space<vmem>>, vector<32x512xi8>
    tpu.vector_store %arg7[%c0_15, %c0_16], %17 {strides = array<i32>} : memref<32x512xi8, #tpu.memory_space<vmem>>, vector<32x512xi8>,
    %cst_17 = arith.constant 1.000000e+00 : f32
    %19 = vector.broadcast %cst_17 : f32 to vector<32x512xf32>
    %20 = arith.cmpf olt, %0, %19 : vector<32x512xf32>
    %21 = arith.extui %20 : vector<32x512xi1> to vector<32x512xi8>
    %c0_18 = arith.constant 0 : index
    %c0_19 = arith.constant 0 : index
    %22 = vector.load %arg8[%c0_18, %c0_19] : memref<32x512xi8, #tpu.memory_space<vmem>>, vector<32x512xi8>
    tpu.vector_store %arg8[%c0_18, %c0_19], %21 {strides = array<i32>} : memref<32x512xi8, #tpu.memory_space<vmem>>, vector<32x512xi8>,
    return
  }
  func.func @transform_0(%arg0: i32) -> (i32, i32) {
    %c0_i32 = arith.constant 0 : i32
    %c0_i32_0 = arith.constant 0 : i32
    return %arg0, %c0_i32 : i32, i32
  }
  func.func @transform_1(%arg0: i32) -> (i32, i32) {
    %c0_i32 = arith.constant 0 : i32
    %c0_i32_0 = arith.constant 0 : i32
    return %arg0, %c0_i32 : i32, i32
  }
  func.func @transform_2(%arg0: i32) -> (i32, i32) {
    %c0_i32 = arith.constant 0 : i32
    %c0_i32_0 = arith.constant 0 : i32
    return %arg0, %c0_i32 : i32, i32
  }
  func.func @transform_3(%arg0: i32) -> (i32, i32) {
    %c0_i32 = arith.constant 0 : i32
    %c0_i32_0 = arith.constant 0 : i32
    return %arg0, %c0_i32 : i32, i32
  }
  func.func @transform_4(%arg0: i32) -> (i32, i32) {
    %c0_i32 = arith.constant 0 : i32
    %c0_i32_0 = arith.constant 0 : i32
    return %arg0, %c0_i32 : i32, i32
  }
  func.func @transform_5(%arg0: i32) -> (i32, i32) {
    %c0_i32 = arith.constant 0 : i32
    %c0_i32_0 = arith.constant 0 : i32
    return %arg0, %c0_i32 : i32, i32
  }
  func.func @transform_6(%arg0: i32) -> (i32, i32) {
    %c0_i32 = arith.constant 0 : i32
    %c0_i32_0 = arith.constant 0 : i32
    return %arg0, %c0_i32 : i32, i32
  }
  func.func @transform_7(%arg0: i32) -> (i32, i32) {
    %c0_i32 = arith.constant 0 : i32
    %c0_i32_0 = arith.constant 0 : i32
    return %arg0, %c0_i32 : i32, i32
  }
}

</mosaic_0001>

<llo_original>
// kernel: tpu_custom_call.1
$region0: #{tpu_custom_call.1}
  #allocation0 [shape = 'u32[]', space=smem, size = 0x4, offset = 0x4, fixed_abs, tag = 'smem constant byte address 0x4 - core index']
  #allocation1 [shape = 'u32[72,128]{1,0:T(1,128)}', space=vmem, size = 0x9000, scoped, tag = 'internal scratch']
  %s0 = inlined_call_operand.hbm [shape: f32[32,512], index: 0, kind: input, shape index: {}]
  %s1 = inlined_call_operand.hbm [shape: f32[32,512], index: 1, kind: output, shape index: {0}]
  %s2 = inlined_call_operand.hbm [shape: f32[32,512], index: 2, kind: output, shape index: {1}]
  %s3 = inlined_call_operand.hbm [shape: f32[32,512], index: 3, kind: output, shape index: {2}]
  %s4 = inlined_call_operand.hbm [shape: f32[32,512], index: 4, kind: output, shape index: {3}]
  %s5 = inlined_call_operand.hbm [shape: f32[32,512], index: 5, kind: output, shape index: {4}]
  %s6 = inlined_call_operand.hbm [shape: s8[32,512], index: 6, kind: output, shape index: {5}]
  %s7 = inlined_call_operand.hbm [shape: s8[32,512], index: 7, kind: output, shape index: {6}]
  %8 = xla_tuple %s1, %s2, %s3, %s4, %s5, %s6, %s7
  %s9 = sld [smem:[#allocation0]]
  $region66: #{tpu_custom_call.1} parent=0
    _
  %s11 = ssub.s32 1, %s9
  %s12 = scalar_select 0, %s11, %s9
  $region1: #{tpu_custom_call.1} parent=0
    #allocation2 [shape = 'u8[65536]{0}', space=vmem, size = 0x10000, scoped, tag = 'input window, operand 0, single buffered']
    #allocation3 [shape = 's32[1]{0}', space=sflag, size = 0x4, scoped, tag = 'scoped memory for tpu_custom_call.1']
    #allocation4 [shape = 's32[1]{0}', space=sflag, size = 0x4, scoped, tag = 'scoped memory for tpu_custom_call.1']
    #allocation5 [shape = 'u8[65536]{0}', space=vmem, size = 0x10000, scoped, tag = 'output window, operand 0, single buffered']
    #allocation6 [shape = 'u8[65536]{0}', space=vmem, size = 0x10000, scoped, tag = 'output window, operand 1, single buffered']
    #allocation7 [shape = 's32[1]{0}', space=sflag, size = 0x4, scoped, tag = 'scoped memory for tpu_custom_call.1']
    #allocation8 [shape = 'u8[65536]{0}', space=vmem, size = 0x10000, scoped, tag = 'output window, operand 2, single buffered']
    #allocation9 [shape = 'u8[65536]{0}', space=vmem, size = 0x10000, scoped, tag = 'output window, operand 3, single buffered']
    #allocation10 [shape = 's32[1]{0}', space=sflag, size = 0x4, scoped, tag = 'scoped memory for tpu_custom_call.1']
    #allocation11 [shape = 'u8[65536]{0}', space=vmem, size = 0x10000, scoped, tag = 'output window, operand 4, single buffered']
    #allocation12 [shape = 'u8[16384]{0}', space=vmem, size = 0x4000, scoped, tag = 'output window, operand 5, single buffered']
    #allocation13 [shape = 's32[1]{0}', space=sflag, size = 0x4, scoped, tag = 'scoped memory for tpu_custom_call.1']
    #allocation14 [shape = 'u8[16384]{0}', space=vmem, size = 0x4000, scoped, tag = 'output window, operand 6, single buffered']
    %13 = vsyncpa [#allocation3], 0
    %14 = vsyncpa [#allocation4], 0
    %15 = vsyncpa [#allocation7], 0
    %16 = vsyncpa [#allocation10], 0
    %17 = vsyncpa [#allocation13], 0
    // Predicated region
    $region2: #{tpu_custom_call.1} parent=1 // pred_check
      _
    $region3: #{tpu_custom_call.1} parent=1 // pred_check_branch
      %19 = sbr.rel (0) target = $region5
    $region4: #{tpu_custom_call.1} parent=1 // pred_region
      %21 = vsyncadd [#allocation3], 0
      %s22 = sshll.u32 %s0, 4
      %s23 = int_to_ptr.hbm [resolvable:$true] %s22
      %s24 = sshll.u32 [#allocation2], 4
      %s25 = int_to_ptr.vmem [resolvable:$true] %s24
      %30 = dma.hbm_to_vmem [thread:$0]  %s23, 2048, %s25, [#allocation3], 512, 512, 32
    $region5: #{tpu_custom_call.1} parent=1 // pred_fallthru
      _
    // Predicated region
    $region6: #{tpu_custom_call.1} parent=1 // pred_check
      _
    $region7: #{tpu_custom_call.1} parent=1 // pred_check_branch
      %32 = sbr.rel (0) target = $region9
    $region8: #{tpu_custom_call.1} parent=1 // pred_region
      %34 = dma.done [#allocation3], 2048
    $region9: #{tpu_custom_call.1} parent=1 // pred_fallthru
      _
    %v37 = vld [vmem:[#allocation2] sm:$0xff]
    %v38 = vld [vmem:[#allocation2 + $0x8] sm:$0xff]
    %v39 = vld [vmem:[#allocation2 + $0x10] sm:$0xff]
    %v40 = vld [vmem:[#allocation2 + $0x18] sm:$0xff]
    %v41 = vld [vmem:[#allocation2 + $0x20] sm:$0xff]
    %v42 = vld [vmem:[#allocation2 + $0x28] sm:$0xff]
    %v43 = vld [vmem:[#allocation2 + $0x30] sm:$0xff]
    %v44 = vld [vmem:[#allocation2 + $0x38] sm:$0xff]
    %v45 = vld [vmem:[#allocation2 + $0x40] sm:$0xff]
    %v46 = vld [vmem:[#allocation2 + $0x48] sm:$0xff]
    %v47 = vld [vmem:[#allocation2 + $0x50] sm:$0xff]
    %v48 = vld [vmem:[#allocation2 + $0x58] sm:$0xff]
    %v49 = vld [vmem:[#allocation2 + $0x60] sm:$0xff]
    %v50 = vld [vmem:[#allocation2 + $0x68] sm:$0xff]
    %v51 = vld [vmem:[#allocation2 + $0x70] sm:$0xff]
    %v52 = vld [vmem:[#allocation2 + $0x78] sm:$0xff]
    %v53 = vadd.f32 %v37, 2.0
    %v54 = vadd.f32 %v38, 2.0
    %v55 = vadd.f32 %v39, 2.0
    %v56 = vadd.f32 %v40, 2.0
    %v57 = vadd.f32 %v41, 2.0
    %v58 = vadd.f32 %v42, 2.0
    %v59 = vadd.f32 %v43, 2.0
    %v60 = vadd.f32 %v44, 2.0
    %v61 = vadd.f32 %v45, 2.0
    %v62 = vadd.f32 %v46, 2.0
    %v63 = vadd.f32 %v47, 2.0
    %v64 = vadd.f32 %v48, 2.0
    %v65 = vadd.f32 %v49, 2.0
    %v66 = vadd.f32 %v50, 2.0
    %v67 = vadd.f32 %v51, 2.0
    %v68 = vadd.f32 %v52, 2.0
    %69 = vst [vmem:[#allocation5] sm:$0xff] %v53
    %70 = vst [vmem:[#allocation5 + $0x8] sm:$0xff] %v54
    %71 = vst [vmem:[#allocation5 + $0x10] sm:$0xff] %v55
    %72 = vst [vmem:[#allocation5 + $0x18] sm:$0xff] %v56
    %73 = vst [vmem:[#allocation5 + $0x20] sm:$0xff] %v57
    %74 = vst [vmem:[#allocation5 + $0x28] sm:$0xff] %v58
    %75 = vst [vmem:[#allocation5 + $0x30] sm:$0xff] %v59
    %76 = vst [vmem:[#allocation5 + $0x38] sm:$0xff] %v60
    %77 = vst [vmem:[#allocation5 + $0x40] sm:$0xff] %v61
    %78 = vst [vmem:[#allocation5 + $0x48] sm:$0xff] %v62
    %79 = vst [vmem:[#allocation5 + $0x50] sm:$0xff] %v63
    %80 = vst [vmem:[#allocation5 + $0x58] sm:$0xff] %v64
    %81 = vst [vmem:[#allocation5 + $0x60] sm:$0xff] %v65
    %82 = vst [vmem:[#allocation5 + $0x68] sm:$0xff] %v66
    %83 = vst [vmem:[#allocation5 + $0x70] sm:$0xff] %v67
    %84 = vst [vmem:[#allocation5 + $0x78] sm:$0xff] %v68
    %v85 = vsub.f32 %v37, 2.0
    %v86 = vsub.f32 %v38, 2.0
    %v87 = vsub.f32 %v39, 2.0
    %v88 = vsub.f32 %v40, 2.0
    %v89 = vsub.f32 %v41, 2.0
    %v90 = vsub.f32 %v42, 2.0
    %v91 = vsub.f32 %v43, 2.0
    %v92 = vsub.f32 %v44, 2.0
    %v93 = vsub.f32 %v45, 2.0
    %v94 = vsub.f32 %v46, 2.0
    %v95 = vsub.f32 %v47, 2.0
    %v96 = vsub.f32 %v48, 2.0
    %v97 = vsub.f32 %v49, 2.0
    %v98 = vsub.f32 %v50, 2.0
    %v99 = vsub.f32 %v51, 2.0
    %v100 = vsub.f32 %v52, 2.0
    %101 = vst [vmem:[#allocation6] sm:$0xff] %v85
    %102 = vst [vmem:[#allocation6 + $0x8] sm:$0xff] %v86
    %103 = vst [vmem:[#allocation6 + $0x10] sm:$0xff] %v87
    %104 = vst [vmem:[#allocation6 + $0x18] sm:$0xff] %v88
    %105 = vst [vmem:[#allocation6 + $0x20] sm:$0xff] %v89
    %106 = vst [vmem:[#allocation6 + $0x28] sm:$0xff] %v90
    %107 = vst [vmem:[#allocation6 + $0x30] sm:$0xff] %v91
    %108 = vst [vmem:[#allocation6 + $0x38] sm:$0xff] %v92
    %109 = vst [vmem:[#allocation6 + $0x40] sm:$0xff] %v93
    %110 = vst [vmem:[#allocation6 + $0x48] sm:$0xff] %v94
    %111 = vst [vmem:[#allocation6 + $0x50] sm:$0xff] %v95
    %112 = vst [vmem:[#allocation6 + $0x58] sm:$0xff] %v96
    %113 = vst [vmem:[#allocation6 + $0x60] sm:$0xff] %v97
    %114 = vst [vmem:[#allocation6 + $0x68] sm:$0xff] %v98
    %115 = vst [vmem:[#allocation6 + $0x70] sm:$0xff] %v99
    %116 = vst [vmem:[#allocation6 + $0x78] sm:$0xff] %v100
    %v117 = vmul.f32 %v37, 2.0
    %v118 = vmul.f32 %v38, 2.0
    %v119 = vmul.f32 %v39, 2.0
    %v120 = vmul.f32 %v40, 2.0
    %v121 = vmul.f32 %v41, 2.0
    %v122 = vmul.f32 %v42, 2.0
    %v123 = vmul.f32 %v43, 2.0
    %v124 = vmul.f32 %v44, 2.0
    %v125 = vmul.f32 %v45, 2.0
    %v126 = vmul.f32 %v46, 2.0
    %v127 = vmul.f32 %v47, 2.0
    %v128 = vmul.f32 %v48, 2.0
    %v129 = vmul.f32 %v49, 2.0
    %v130 = vmul.f32 %v50, 2.0
    %v131 = vmul.f32 %v51, 2.0
    %v132 = vmul.f32 %v52, 2.0
    %133 = vst [vmem:[#allocation8] sm:$0xff] %v117
    %134 = vst [vmem:[#allocation8 + $0x8] sm:$0xff] %v118
    %135 = vst [vmem:[#allocation8 + $0x10] sm:$0xff] %v119
    %136 = vst [vmem:[#allocation8 + $0x18] sm:$0xff] %v120
    %137 = vst [vmem:[#allocation8 + $0x20] sm:$0xff] %v121
    %138 = vst [vmem:[#allocation8 + $0x28] sm:$0xff] %v122
    %139 = vst [vmem:[#allocation8 + $0x30] sm:$0xff] %v123
    %140 = vst [vmem:[#allocation8 + $0x38] sm:$0xff] %v124
    %141 = vst [vmem:[#allocation8 + $0x40] sm:$0xff] %v125
    %142 = vst [vmem:[#allocation8 + $0x48] sm:$0xff] %v126
    %143 = vst [vmem:[#allocation8 + $0x50] sm:$0xff] %v127
    %144 = vst [vmem:[#allocation8 + $0x58] sm:$0xff] %v128
    %145 = vst [vmem:[#allocation8 + $0x60] sm:$0xff] %v129
    %146 = vst [vmem:[#allocation8 + $0x68] sm:$0xff] %v130
    %147 = vst [vmem:[#allocation8 + $0x70] sm:$0xff] %v131
    %148 = vst [vmem:[#allocation8 + $0x78] sm:$0xff] %v132
    %v149 = vmul.f32 %v37, 0.5
    %v150 = vmul.f32 %v38, 0.5
    %v151 = vmul.f32 %v39, 0.5
    %v152 = vmul.f32 %v40, 0.5
    %v153 = vmul.f32 %v41, 0.5
    %v154 = vmul.f32 %v42, 0.5
    %v155 = vmul.f32 %v43, 0.5
    %v156 = vmul.f32 %v44, 0.5
    %v157 = vmul.f32 %v45, 0.5
    %v158 = vmul.f32 %v46, 0.5
    %v159 = vmul.f32 %v47, 0.5
    %v160 = vmul.f32 %v48, 0.5
    %v161 = vmul.f32 %v49, 0.5
    %v162 = vmul.f32 %v50, 0.5
    %v163 = vmul.f32 %v51, 0.5
    %v164 = vmul.f32 %v52, 0.5
    %165 = vst [vmem:[#allocation9] sm:$0xff] %v149
    %166 = vst [vmem:[#allocation9 + $0x8] sm:$0xff] %v150
    %167 = vst [vmem:[#allocation9 + $0x10] sm:$0xff] %v151
    %168 = vst [vmem:[#allocation9 + $0x18] sm:$0xff] %v152
    %169 = vst [vmem:[#allocation9 + $0x20] sm:$0xff] %v153
    %170 = vst [vmem:[#allocation9 + $0x28] sm:$0xff] %v154
    %171 = vst [vmem:[#allocation9 + $0x30] sm:$0xff] %v155
    %172 = vst [vmem:[#allocation9 + $0x38] sm:$0xff] %v156
    %173 = vst [vmem:[#allocation9 + $0x40] sm:$0xff] %v157
    %174 = vst [vmem:[#allocation9 + $0x48] sm:$0xff] %v158
    %175 = vst [vmem:[#allocation9 + $0x50] sm:$0xff] %v159
    %176 = vst [vmem:[#allocation9 + $0x58] sm:$0xff] %v160
    %177 = vst [vmem:[#allocation9 + $0x60] sm:$0xff] %v161
    %178 = vst [vmem:[#allocation9 + $0x68] sm:$0xff] %v162
    %179 = vst [vmem:[#allocation9 + $0x70] sm:$0xff] %v163
    %180 = vst [vmem:[#allocation9 + $0x78] sm:$0xff] %v164
    %v181 = vmul.f32 %v37, %v37
    %v182 = vmul.f32 %v38, %v38
    %v183 = vmul.f32 %v39, %v39
    %v184 = vmul.f32 %v40, %v40
    %v185 = vmul.f32 %v41, %v41
    %v186 = vmul.f32 %v42, %v42
    %v187 = vmul.f32 %v43, %v43
    %v188 = vmul.f32 %v44, %v44
    %v189 = vmul.f32 %v45, %v45
    %v190 = vmul.f32 %v46, %v46
    %v191 = vmul.f32 %v47, %v47
    %v192 = vmul.f32 %v48, %v48
    %v193 = vmul.f32 %v49, %v49
    %v194 = vmul.f32 %v50, %v50
    %v195 = vmul.f32 %v51, %v51
    %v196 = vmul.f32 %v52, %v52
    %197 = vst [vmem:[#allocation11] sm:$0xff] %v181
    %198 = vst [vmem:[#allocation11 + $0x8] sm:$0xff] %v182
    %199 = vst [vmem:[#allocation11 + $0x10] sm:$0xff] %v183
    %200 = vst [vmem:[#allocation11 + $0x18] sm:$0xff] %v184
    %201 = vst [vmem:[#allocation11 + $0x20] sm:$0xff] %v185
    %202 = vst [vmem:[#allocation11 + $0x28] sm:$0xff] %v186
    %203 = vst [vmem:[#allocation11 + $0x30] sm:$0xff] %v187
    %204 = vst [vmem:[#allocation11 + $0x38] sm:$0xff] %v188
    %205 = vst [vmem:[#allocation11 + $0x40] sm:$0xff] %v189
    %206 = vst [vmem:[#allocation11 + $0x48] sm:$0xff] %v190
    %207 = vst [vmem:[#allocation11 + $0x50] sm:$0xff] %v191
    %208 = vst [vmem:[#allocation11 + $0x58] sm:$0xff] %v192
    %209 = vst [vmem:[#allocation11 + $0x60] sm:$0xff] %v193
    %210 = vst [vmem:[#allocation11 + $0x68] sm:$0xff] %v194
    %211 = vst [vmem:[#allocation11 + $0x70] sm:$0xff] %v195
    %212 = vst [vmem:[#allocation11 + $0x78] sm:$0xff] %v196
    %vm213 = vcmp.gt.f32.partialorder %v37, 1.0
    %vm214 = vcmp.gt.f32.partialorder %v38, 1.0
    %vm215 = vcmp.gt.f32.partialorder %v39, 1.0
    %vm216 = vcmp.gt.f32.partialorder %v40, 1.0
    %vm217 = vcmp.gt.f32.partialorder %v41, 1.0
    %vm218 = vcmp.gt.f32.partialorder %v42, 1.0
    %vm219 = vcmp.gt.f32.partialorder %v43, 1.0
    %vm220 = vcmp.gt.f32.partialorder %v44, 1.0
    %vm221 = vcmp.gt.f32.partialorder %v45, 1.0
    %vm222 = vcmp.gt.f32.partialorder %v46, 1.0
    %vm223 = vcmp.gt.f32.partialorder %v47, 1.0
    %vm224 = vcmp.gt.f32.partialorder %v48, 1.0
    %vm225 = vcmp.gt.f32.partialorder %v49, 1.0
    %vm226 = vcmp.gt.f32.partialorder %v50, 1.0
    %vm227 = vcmp.gt.f32.partialorder %v51, 1.0
    %vm228 = vcmp.gt.f32.partialorder %v52, 1.0
    %vm229 = vmpackc.low %vm217, %vm213
    %vm230 = vmpackc.low %vm225, %vm221
    %v231 = vsel %vm229, 16711935, 0
    %v232 = vsel %vm230, 16711935, 0
    %v233 = vpack.c.b8 %v232, %v231
    %vm234 = vnez %v233
    %vm235 = vmpackc.low %vm218, %vm214
    %vm236 = vmpackc.low %vm226, %vm222
    %v237 = vsel %vm235, 16711935, 0
    %v238 = vsel %vm236, 16711935, 0
    %v239 = vpack.c.b8 %v238, %v237
    %vm240 = vnez %v239
    %vm241 = vmpackc.low %vm219, %vm215
    %vm242 = vmpackc.low %vm227, %vm223
    %v243 = vsel %vm241, 16711935, 0
    %v244 = vsel %vm242, 16711935, 0
    %v245 = vpack.c.b8 %v244, %v243
    %vm246 = vnez %v245
    %vm247 = vmpackc.low %vm220, %vm216
    %vm248 = vmpackc.low %vm228, %vm224
    %v249 = vsel %vm247, 16711935, 0
    %v250 = vsel %vm248, 16711935, 0
    %v251 = vpack.c.b8 %v250, %v249
    %vm252 = vnez %v251
    %v253 = vsel %vm234, 16843009, 0
    %v254 = vsel %vm240, 16843009, 0
    %v255 = vsel %vm246, 16843009, 0
    %v256 = vsel %vm252, 16843009, 0
    %257 = vst [vmem:[#allocation12] sm:$0xff] %v253
    %258 = vst [vmem:[#allocation12 + $0x8] sm:$0xff] %v254
    %259 = vst [vmem:[#allocation12 + $0x10] sm:$0xff] %v255
    %260 = vst [vmem:[#allocation12 + $0x18] sm:$0xff] %v256
    %vm261 = vcmp.lt.f32.partialorder %v37, 1.0
    %vm262 = vcmp.lt.f32.partialorder %v38, 1.0
    %vm263 = vcmp.lt.f32.partialorder %v39, 1.0
    %vm264 = vcmp.lt.f32.partialorder %v40, 1.0
    %vm265 = vcmp.lt.f32.partialorder %v41, 1.0
    %vm266 = vcmp.lt.f32.partialorder %v42, 1.0
    %vm267 = vcmp.lt.f32.partialorder %v43, 1.0
    %vm268 = vcmp.lt.f32.partialorder %v44, 1.0
    %vm269 = vcmp.lt.f32.partialorder %v45, 1.0
    %vm270 = vcmp.lt.f32.partialorder %v46, 1.0
    %vm271 = vcmp.lt.f32.partialorder %v47, 1.0
    %vm272 = vcmp.lt.f32.partialorder %v48, 1.0
    %vm273 = vcmp.lt.f32.partialorder %v49, 1.0
    %vm274 = vcmp.lt.f32.partialorder %v50, 1.0
    %vm275 = vcmp.lt.f32.partialorder %v51, 1.0
    %vm276 = vcmp.lt.f32.partialorder %v52, 1.0
    %vm277 = vmpackc.low %vm265, %vm261
    %vm278 = vmpackc.low %vm273, %vm269
    %v279 = vsel %vm277, 16711935, 0
    %v280 = vsel %vm278, 16711935, 0
    %v281 = vpack.c.b8 %v280, %v279
    %vm282 = vnez %v281
    %vm283 = vmpackc.low %vm266, %vm262
    %vm284 = vmpackc.low %vm274, %vm270
    %v285 = vsel %vm283, 16711935, 0
    %v286 = vsel %vm284, 16711935, 0
    %v287 = vpack.c.b8 %v286, %v285
    %vm288 = vnez %v287
    %vm289 = vmpackc.low %vm267, %vm263
    %vm290 = vmpackc.low %vm275, %vm271
    %v291 = vsel %vm289, 16711935, 0
    %v292 = vsel %vm290, 16711935, 0
    %v293 = vpack.c.b8 %v292, %v291
    %vm294 = vnez %v293
    %vm295 = vmpackc.low %vm268, %vm264
    %vm296 = vmpackc.low %vm276, %vm272
    %v297 = vsel %vm295, 16711935, 0
    %v298 = vsel %vm296, 16711935, 0
    %v299 = vpack.c.b8 %v298, %v297
    %vm300 = vnez %v299
    %v301 = vsel %vm282, 16843009, 0
    %v302 = vsel %vm288, 16843009, 0
    %v303 = vsel %vm294, 16843009, 0
    %v304 = vsel %vm300, 16843009, 0
    %305 = vst [vmem:[#allocation14] sm:$0xff] %v301
    %306 = vst [vmem:[#allocation14 + $0x8] sm:$0xff] %v302
    %307 = vst [vmem:[#allocation14 + $0x10] sm:$0xff] %v303
    %308 = vst [vmem:[#allocation14 + $0x18] sm:$0xff] %v304
    // Predicated region
    $region10: #{tpu_custom_call.1} parent=1 // pred_check
      _
    $region11: #{tpu_custom_call.1} parent=1 // pred_check_branch
      %310 = sbr.rel (0) target = $region13
    $region12: #{tpu_custom_call.1} parent=1 // pred_region
      %312 = vsyncadd [#allocation4], 0
      %s313 = sshll.u32 [#allocation5], 4
      %s314 = int_to_ptr.vmem [resolvable:$true] %s313
      %s315 = sshll.u32 %s1, 4
      %s316 = int_to_ptr.hbm [resolvable:$true] %s315
      %321 = dma.vmem_to_hbm [thread:$0]  %s314, 2048, %s316, [#allocation4], 512, 512, 32
    $region13: #{tpu_custom_call.1} parent=1 // pred_fallthru
      _
    // Predicated region
    $region14: #{tpu_custom_call.1} parent=1 // pred_check
      _
    $region15: #{tpu_custom_call.1} parent=1 // pred_check_branch
      %323 = sbr.rel (0) target = $region17
    $region16: #{tpu_custom_call.1} parent=1 // pred_region
      %325 = vsyncadd [#allocation7], 0
      %s326 = sshll.u32 [#allocation6], 4
      %s327 = int_to_ptr.vmem [resolvable:$true] %s326
      %s328 = sshll.u32 %s2, 4
      %s329 = int_to_ptr.hbm [resolvable:$true] %s328
      %334 = dma.vmem_to_hbm [thread:$0]  %s327, 2048, %s329, [#allocation7], 512, 512, 32
    $region17: #{tpu_custom_call.1} parent=1 // pred_fallthru
      _
    // Predicated region
    $region18: #{tpu_custom_call.1} parent=1 // pred_check
      _
    $region19: #{tpu_custom_call.1} parent=1 // pred_check_branch
      %336 = sbr.rel (0) target = $region21
    $region20: #{tpu_custom_call.1} parent=1 // pred_region
      %338 = vsyncadd [#allocation7], 0
      %s339 = sshll.u32 [#allocation8], 4
      %s340 = int_to_ptr.vmem [resolvable:$true] %s339
      %s341 = sshll.u32 %s3, 4
      %s342 = int_to_ptr.hbm [resolvable:$true] %s341
      %347 = dma.vmem_to_hbm [thread:$0]  %s340, 2048, %s342, [#allocation7], 512, 512, 32
    $region21: #{tpu_custom_call.1} parent=1 // pred_fallthru
      _
    // Predicated region
    $region22: #{tpu_custom_call.1} parent=1 // pred_check
      _
    $region23: #{tpu_custom_call.1} parent=1 // pred_check_branch
      %349 = sbr.rel (0) target = $region25
    $region24: #{tpu_custom_call.1} parent=1 // pred_region
      %351 = vsyncadd [#allocation10], 0
      %s352 = sshll.u32 [#allocation9], 4
      %s353 = int_to_ptr.vmem [resolvable:$true] %s352
      %s354 = sshll.u32 %s4, 4
      %s355 = int_to_ptr.hbm [resolvable:$true] %s354
      %360 = dma.vmem_to_hbm [thread:$0]  %s353, 2048, %s355, [#allocation10], 512, 512, 32
    $region25: #{tpu_custom_call.1} parent=1 // pred_fallthru
      _
    // Predicated region
    $region26: #{tpu_custom_call.1} parent=1 // pred_check
      _
    $region27: #{tpu_custom_call.1} parent=1 // pred_check_branch
      %362 = sbr.rel (0) target = $region29
    $region28: #{tpu_custom_call.1} parent=1 // pred_region
      %364 = vsyncadd [#allocation10], 0
      %s365 = sshll.u32 [#allocation11], 4
      %s366 = int_to_ptr.vmem [resolvable:$true] %s365
      %s367 = sshll.u32 %s5, 4
      %s368 = int_to_ptr.hbm [resolvable:$true] %s367
      %373 = dma.vmem_to_hbm [thread:$0]  %s366, 2048, %s368, [#allocation10], 512, 512, 32
    $region29: #{tpu_custom_call.1} parent=1 // pred_fallthru
      _
    // Predicated region
    $region30: #{tpu_custom_call.1} parent=1 // pred_check
      _
    $region31: #{tpu_custom_call.1} parent=1 // pred_check_branch
      %375 = sbr.rel (0) target = $region33
    $region32: #{tpu_custom_call.1} parent=1 // pred_region
      %377 = vsyncadd [#allocation13], 0
      %s379 = sshll.u32 [#allocation12], 4
      %s380 = int_to_ptr.vmem [resolvable:$true] %s379
      %s381 = sshll.u32 %s6, 4
      %s382 = int_to_ptr.hbm [resolvable:$true] %s381
      %384 = dma.vmem_to_hbm [thread:$0]  %s380, 512, %s382, [#allocation13]
    $region33: #{tpu_custom_call.1} parent=1 // pred_fallthru
      _
    // Predicated region
    $region34: #{tpu_custom_call.1} parent=1 // pred_check
      _
    $region35: #{tpu_custom_call.1} parent=1 // pred_check_branch
      %386 = sbr.rel (0) target = $region37
    $region36: #{tpu_custom_call.1} parent=1 // pred_region
      %388 = vsyncadd [#allocation13], 0
      %s390 = sshll.u32 [#allocation14], 4
      %s391 = int_to_ptr.vmem [resolvable:$true] %s390
      %s392 = sshll.u32 %s7, 4
      %s393 = int_to_ptr.hbm [resolvable:$true] %s392
      %395 = dma.vmem_to_hbm [thread:$0]  %s391, 512, %s393, [#allocation13]
    $region37: #{tpu_custom_call.1} parent=1 // pred_fallthru
      _
    // Predicated region
    $region38: #{tpu_custom_call.1} parent=1 // pred_check
      _
    $region39: #{tpu_custom_call.1} parent=1 // pred_check_branch
      %397 = sbr.rel (0) target = $region41
    $region40: #{tpu_custom_call.1} parent=1 // pred_region
      %399 = dma.done [#allocation4], 2048
    $region41: #{tpu_custom_call.1} parent=1 // pred_fallthru
      _
    // Predicated region
    $region42: #{tpu_custom_call.1} parent=1 // pred_check
      _
    $region43: #{tpu_custom_call.1} parent=1 // pred_check_branch
      %401 = sbr.rel (0) target = $region45
    $region44: #{tpu_custom_call.1} parent=1 // pred_region
      %403 = dma.done [#allocation7], 2048
    $region45: #{tpu_custom_call.1} parent=1 // pred_fallthru
      _
    // Predicated region
    $region46: #{tpu_custom_call.1} parent=1 // pred_check
      _
    $region47: #{tpu_custom_call.1} parent=1 // pred_check_branch
      %405 = sbr.rel (0) target = $region49
    $region48: #{tpu_custom_call.1} parent=1 // pred_region
      %407 = dma.done [#allocation7], 2048
    $region49: #{tpu_custom_call.1} parent=1 // pred_fallthru
      _
    // Predicated region
    $region50: #{tpu_custom_call.1} parent=1 // pred_check
      _
    $region51: #{tpu_custom_call.1} parent=1 // pred_check_branch
      %409 = sbr.rel (0) target = $region53
    $region52: #{tpu_custom_call.1} parent=1 // pred_region
      %411 = dma.done [#allocation10], 2048
    $region53: #{tpu_custom_call.1} parent=1 // pred_fallthru
      _
    // Predicated region
    $region54: #{tpu_custom_call.1} parent=1 // pred_check
      _
    $region55: #{tpu_custom_call.1} parent=1 // pred_check_branch
      %413 = sbr.rel (0) target = $region57
    $region56: #{tpu_custom_call.1} parent=1 // pred_region
      %415 = dma.done [#allocation10], 2048
    $region57: #{tpu_custom_call.1} parent=1 // pred_fallthru
      _
    // Predicated region
    $region58: #{tpu_custom_call.1} parent=1 // pred_check
      _
    $region59: #{tpu_custom_call.1} parent=1 // pred_check_branch
      %417 = sbr.rel (0) target = $region61
    $region60: #{tpu_custom_call.1} parent=1 // pred_region
      %419 = dma.done [#allocation13], 512
    $region61: #{tpu_custom_call.1} parent=1 // pred_fallthru
      _
    // Predicated region
    $region62: #{tpu_custom_call.1} parent=1 // pred_check
      _
    $region63: #{tpu_custom_call.1} parent=1 // pred_check_branch
      %421 = sbr.rel (0) target = $region65
    $region64: #{tpu_custom_call.1} parent=1 // pred_region
      %423 = dma.done [#allocation13], 512
    $region65: #{tpu_custom_call.1} parent=1 // pred_fallthru
      _
    %424 = vsyncpa [#allocation3], 1
    %425 = vsyncpa [#allocation4], 1
    %426 = vsyncpa [#allocation7], 1
    %427 = vsyncpa [#allocation10], 1
    %428 = vsyncpa [#allocation13], 1

</llo_original>
